<compile_context>
chip_gen: v7x
topology: tpu7x:2x2x1
jax: 0.10.0
libtpu: 0.0.40
codegen_flags: <defaults>
</compile_context>

<pallas_src>
import jax
import jax.numpy as jnp
from jax.experimental import pallas as pl
from jax.experimental.pallas import tpu as pltpu

MAX_CRACKS = 3  # config.max_cracks (DataGenerationConfig) -- synthetic choice


def _round_up(x, m):
    return ((x + m - 1) // m) * m


def _loc_kernel(x_ref, wt_ref, b_ref, o_ref):
    # x_ref: (tb, F) ; wt_ref: (F, O) ; b_ref: (1, O) ; o_ref: (tb, O)
    raw = jnp.dot(x_ref[...], wt_ref[...], preferred_element_type=jnp.float32)
    raw = raw + b_ref[...].astype(jnp.float32)            # bias broadcast over rows
    o_ref[...] = jax.nn.sigmoid(raw).astype(o_ref.dtype)  # sigmoid in f32 (EUP)


def localization_output(x, weight, bias, *, block_b=None,
                        use_bf16_matmul=True, out_dtype=jnp.float32):
    """Equivalent of: sigmoid(x @ W.T + b).reshape(-1, MAX_CRACKS, 2).

    x:      (B, F)   activations
    weight: (O, F)   PyTorch nn.Linear weight, O = MAX_CRACKS * 2
    bias:   (O,)
    """
    B, F = x.shape
    O = weight.shape[0]
    assert O == MAX_CRACKS * 2, (
        f"weight.shape[0]={O} inconsistent with MAX_CRACKS*2={MAX_CRACKS * 2}")
    assert weight.shape[1] == F, "weight in_features mismatch"

    # Narrow only the MXU operands; accumulate / bias / sigmoid stay in f32.
    in_dtype = jnp.bfloat16 if use_bf16_matmul else x.dtype
    x_in = x.astype(in_dtype)
    wt = weight.T.astype(in_dtype)              # (F, O): one tiny 6x32 transpose
    b2 = bias.reshape(1, O).astype(jnp.float32)

    x_item = jnp.dtype(in_dtype).itemsize
    out_item = jnp.dtype(out_dtype).itemsize
    cost = pl.CostEstimate(
        flops=2 * B * F * O,
        transcendentals=B * O,                  # sigmoid exp
        bytes_accessed=(B * F * x_item + F * O * x_item
                        + B * O * out_item + O * 4),
    )

    f_pad = _round_up(F, 128)   # x tile lane-pads F -> 128 in VMEM
    o_pad = _round_up(O, 128)   # out tile lane-pads O -> 128 in VMEM

    if block_b is None:
        # Size tb so each x tile buffer is ~4 MiB (overhead-amortizing DMAs).
        target_bytes = 4 << 20
        block_b = max(128, (target_bytes // (f_pad * x_item)) // 128 * 128)

    # ---------- small-batch path: single block, no grid, no pipelining ------
    if B <= block_b and B <= 1024:
        out = pl.pallas_call(
            _loc_kernel,
            out_shape=jax.ShapeDtypeStruct((B, O), out_dtype),
            in_specs=[
                pl.BlockSpec(memory_space=pltpu.MemorySpace.VMEM),
                pl.BlockSpec(memory_space=pltpu.MemorySpace.VMEM),
                pl.BlockSpec(memory_space=pltpu.MemorySpace.VMEM),
            ],
            out_specs=pl.BlockSpec(memory_space=pltpu.MemorySpace.VMEM),
            cost_estimate=cost,
        )(x_in, wt, b2)
        return out.reshape(-1, MAX_CRACKS, 2)

    # ---------- large-batch path: stream batch tiles, weights resident ------
    # Guarantee >= 2 grid steps so both TensorCores get work on v7x.
    tb = max(128, min(block_b, _round_up(pl.cdiv(B, 2), 128)))

    # Hardware-aware VMEM cap (v7x physical VMEM is only 64 MiB).
    try:
        phys_vmem = int(pltpu.get_tpu_info().vmem_capacity_bytes)
    except Exception:
        phys_vmem = 64 << 20
    vmem_cap = min(48 << 20, phys_vmem * 3 // 4)

    def _vmem_need(t):
        return (2 * t * f_pad * x_item            # double-buffered x tile (lane-padded)
                + 2 * t * o_pad * out_item        # double-buffered out tile (lane-padded)
                + _round_up(F, 8) * o_pad * x_item  # resident W^T
                + 8 * 128 * 4                     # bias
                + (1 << 20))                      # Mosaic scratch slack

    while tb > 128 and _vmem_need(tb) > vmem_cap:
        tb = _round_up(tb // 2, 128)
    vmem_limit = int(min(vmem_cap, max(16 << 20, 2 * _vmem_need(tb))))

    grid = (pl.cdiv(B, tb),)   # no jnp.pad: boundary block's OOB writes are masked
    out = pl.pallas_call(
        _loc_kernel,
        out_shape=jax.ShapeDtypeStruct((B, O), out_dtype),
        grid=grid,
        in_specs=[
            pl.BlockSpec((tb, F), lambda i: (i, 0)),   # streamed x tile
            pl.BlockSpec((F, O), lambda i: (0, 0)),    # resident W^T
            pl.BlockSpec((1, O), lambda i: (0, 0)),    # resident bias
        ],
        out_specs=pl.BlockSpec((tb, O), lambda i: (i, 0)),  # direct (B, O) output
        compiler_params=pltpu.CompilerParams(
            dimension_semantics=("parallel",),
            vmem_limit_bytes=vmem_limit,
        ),
        cost_estimate=cost,
    )(x_in, wt, b2)
    return out.reshape(-1, MAX_CRACKS, 2)


if __name__ == "__main__":
    key = jax.random.PRNGKey(0)
    k_x, k_w, k_b, k_x2 = jax.random.split(key, 4)

    in_features = 32
    out_features = MAX_CRACKS * 2

    # Deterministic "nn.Linear" init (uniform in +/- 1/sqrt(in_features))
    bound = 1.0 / (in_features ** 0.5)
    weight = jax.random.uniform(
        k_w, (out_features, in_features), minval=-bound, maxval=bound,
        dtype=jnp.float32)
    bias = jax.random.uniform(
        k_b, (out_features,), minval=-bound, maxval=bound, dtype=jnp.float32)

    def ref_fn(xx):
        return jax.nn.sigmoid(xx @ weight.T + bias).reshape(-1, MAX_CRACKS, 2)

    # --- small batch: single-block (no-grid) path ----------------------------
    batch = 8
    x = jax.random.normal(k_x, (batch, in_features), dtype=jnp.float32)

    coords_f32 = localization_output(x, weight, bias, use_bf16_matmul=False)
    jax.block_until_ready(coords_f32)
    assert coords_f32.shape == (batch, MAX_CRACKS, 2)
    assert jnp.allclose(coords_f32, ref_fn(x), atol=1e-5), "small-batch f32 mismatch"

    coords_bf16 = localization_output(x, weight, bias)      # default bf16 operands
    jax.block_until_ready(coords_bf16)
    assert jnp.allclose(coords_bf16, ref_fn(x), atol=2e-2), "small-batch bf16 mismatch"

    # --- ragged larger batch (300 rows, tb=128): tiled path, boundary masked --
    batch2 = 300
    x2 = jax.random.normal(k_x2, (batch2, in_features), dtype=jnp.float32)

    coords2_f32 = localization_output(x2, weight, bias, block_b=128,
                                      use_bf16_matmul=False)
    jax.block_until_ready(coords2_f32)
    assert coords2_f32.shape == (batch2, MAX_CRACKS, 2)
    assert jnp.all(jnp.isfinite(coords2_f32))
    assert jnp.allclose(coords2_f32, ref_fn(x2), atol=1e-5), "tiled f32 mismatch"

    coords2_bf16 = localization_output(x2, weight, bias, block_b=128)
    jax.block_until_ready(coords2_bf16)
    assert jnp.allclose(coords2_bf16, ref_fn(x2), atol=2e-2), "tiled bf16 mismatch"

    print("KERNEL_OK")
</pallas_src>

<mosaic_0001>
module attributes {stable_mosaic.version = 11 : i64} {
  func.func @_loc_kernel(%arg0: memref<8x32xf32, #tpu.memory_space<vmem>>, %arg1: memref<32x6xf32, #tpu.memory_space<vmem>>, %arg2: memref<1x6xf32, #tpu.memory_space<vmem>>, %arg3: memref<8x6xf32, #tpu.memory_space<vmem>>) attributes {dimension_semantics = [], scalar_prefetch = 0 : i64, scratch_operands = 0 : i64, tpu.core_type = #tpu.core_type<tc>} {
    %c0 = arith.constant 0 : index
    %c0_0 = arith.constant 0 : index
    %0 = vector.load %arg0[%c0, %c0_0] : memref<8x32xf32, #tpu.memory_space<vmem>>, vector<8x32xf32>
    %c0_1 = arith.constant 0 : index
    %c0_2 = arith.constant 0 : index
    %1 = vector.load %arg1[%c0_1, %c0_2] : memref<32x6xf32, #tpu.memory_space<vmem>>, vector<32x6xf32>
    %cst = arith.constant dense<0.000000e+00> : vector<8x6xf32>
    %2 = tpu.matmul %0, %1, %cst {dimension_numbers = #tpu.dot_dimension_numbers<[1], [0], [0], [1], [0, 0, 1, 1], [], []>} : vector<8x32xf32>, vector<32x6xf32>, vector<8x6xf32> -> vector<8x6xf32>
    %c0_3 = arith.constant 0 : index
    %c0_4 = arith.constant 0 : index
    %3 = vector.load %arg2[%c0_3, %c0_4] : memref<1x6xf32, #tpu.memory_space<vmem>>, vector<1x6xf32>
    %4 = vector.broadcast %3 : vector<1x6xf32> to vector<8x6xf32>
    %5 = arith.addf %2, %4 : vector<8x6xf32>
    %6 = arith.negf %5 : vector<8x6xf32>
    %7 = math.exp %6 : vector<8x6xf32>
    %cst_5 = arith.constant 1.000000e+00 : f32
    %8 = vector.broadcast %cst_5 : f32 to vector<8x6xf32>
    %9 = arith.addf %8, %7 : vector<8x6xf32>
    %10 = arith.divf %8, %9 : vector<8x6xf32>
    %c0_6 = arith.constant 0 : index
    %c0_7 = arith.constant 0 : index
    %11 = vector.load %arg3[%c0_6, %c0_7] : memref<8x6xf32, #tpu.memory_space<vmem>>, vector<8x6xf32>
    tpu.vector_store %arg3[%c0_6, %c0_7], %10 {strides = array<i32>} : memref<8x6xf32, #tpu.memory_space<vmem>>, vector<8x6xf32>,
    return
  }
}

</mosaic_0001>

<llo_original>
// kernel: tpu_custom_call.1
$region0: #{tpu_custom_call.1}
  #allocation0 [shape = 'u32[]', space=smem, size = 0x4, offset = 0x4, fixed_abs, tag = 'smem constant byte address 0x4 - core index']
  #allocation1 [shape = 'u32[144,128]{1,0:T(1,128)}', space=vmem, size = 0x12000, scoped, tag = 'internal scratch']
  %s0 = inlined_call_operand.vmem [shape: f32[8,32], index: 0, kind: input, shape index: {}]
  %s1 = inlined_call_operand.vmem [shape: f32[32,6], index: 1, kind: input, shape index: {}]
  %s2 = inlined_call_operand.vmem [shape: f32[1,6], index: 2, kind: input, shape index: {}]
  %s3 = inlined_call_operand.hbm [shape: f32[8,6], index: 3, kind: output, shape index: {}]
  %s4 = sld [smem:[#allocation0]]
  $region22: #{tpu_custom_call.1} parent=0
    _
  %s6 = ssub.s32 1, %s4
  %s7 = scalar_select 0, %s6, %s4
  $region1: #{tpu_custom_call.1} parent=0
    #allocation2 [shape = 'u8[4096]{0}', space=vmem, size = 0x1000, scoped, tag = 'output window, operand 0, single buffered']
    #allocation3 [shape = 's32[1]{0}', space=sflag, size = 0x4, scoped, tag = 'scoped memory for tpu_custom_call.1']
    %8 = vsyncpa [#allocation3], 0
    // Predicated region
    $region2: #{tpu_custom_call.1} parent=1 // pred_check
      _
    $region3: #{tpu_custom_call.1} parent=1 // pred_check_branch
      %10 = sbr.rel (0) target = $region5
    $region4: #{tpu_custom_call.1} parent=1 // pred_region
      _
    $region5: #{tpu_custom_call.1} parent=1 // pred_fallthru
      _
    // Predicated region
    $region6: #{tpu_custom_call.1} parent=1 // pred_check
      _
    $region7: #{tpu_custom_call.1} parent=1 // pred_check_branch
      %12 = sbr.rel (0) target = $region9
    $region8: #{tpu_custom_call.1} parent=1 // pred_region
      _
    $region9: #{tpu_custom_call.1} parent=1 // pred_fallthru
      _
    // Predicated region
    $region10: #{tpu_custom_call.1} parent=1 // pred_check
      _
    $region11: #{tpu_custom_call.1} parent=1 // pred_check_branch
      %14 = sbr.rel (0) target = $region13
    $region12: #{tpu_custom_call.1} parent=1 // pred_region
      _
    $region13: #{tpu_custom_call.1} parent=1 // pred_fallthru
      _
    %v15 = vld [vmem:[%s0] sm:$0xff]
    %v16 = vld [vmem:[%s1] sm:$0xff]
    %v17 = vld [vmem:[%s1 + $0x8] sm:$0xff]
    %v18 = vld [vmem:[%s1 + $0x10] sm:$0xff]
    %v19 = vld [vmem:[%s1 + $0x18] sm:$0xff]
    %v20 = vld [vmem:[%s2] sm:$0x1]
    %v22 = vlaneseq
    %v23 = vshrl.u32 %v22, 7
    %v24 = vsub.s32 0, %v23
    %v25 = vrot.slane %v20, %v24
    %vm27 = vcmask 261120
    %v29 = vsel %vm27, %v15, 0
    %31 = vmatprep.subr.mxu0 0.0
    %32 = vmatpush1.msra.mxu0 %v16
    %33 = vmatprep.subr.mxu0 0.0
    %34 = vmatpush1.msra.mxu0 %v17
    %35 = vmatprep.subr.mxu0 0.0
    %36 = vmatpush1.msra.mxu0 %v18
    %37 = vmatprep.subr.mxu0 0.0
    %38 = vmatpush1.msra.mxu0 %v19
    %39 = vmatprep.subr.mxu0 0.0
    %40 = vmatpush1.msra.mxu0 0.0
    %41 = vmatprep.subr.mxu0 0.0
    %42 = vmatpush1.msra.mxu0 0.0
    %43 = vmatprep.subr.mxu0 0.0
    %44 = vmatpush1.msra.mxu0 0.0
    %45 = vmatprep.subr.mxu0 0.0
    %46 = vmatpush1.msra.mxu0 0.0
    %47 = vmatprep.subr.mxu0 0.0
    %48 = vmatpush1.msra.mxu0 0.0
    %49 = vmatprep.subr.mxu0 0.0
    %50 = vmatpush1.msra.mxu0 0.0
    %51 = vmatprep.subr.mxu0 0.0
    %52 = vmatpush1.msra.mxu0 0.0
    %53 = vmatprep.subr.mxu0 0.0
    %54 = vmatpush1.msra.mxu0 0.0
    %55 = vmatprep.subr.mxu0 0.0
    %56 = vmatpush1.msra.mxu0 0.0
    %57 = vmatprep.subr.mxu0 0.0
    %58 = vmatpush1.msra.mxu0 0.0
    %59 = vmatprep.subr.mxu0 0.0
    %60 = vmatpush1.msra.mxu0 0.0
    %61 = vmatprep.subr.mxu0 0.0
    %62 = vmatpush1.msra.mxu0 0.0
    %63 = vmatprep.subr.mxu0 0.0
    %64 = vmatpush1.msra.mxu0 0.0
    %65 = vmatprep.subr.mxu0 0.0
    %66 = vmatpush1.msra.mxu0 0.0
    %67 = vmatprep.subr.mxu0 0.0
    %68 = vmatpush1.msra.mxu0 0.0
    %69 = vmatprep.subr.mxu0 0.0
    %70 = vmatpush1.msra.mxu0 0.0
    %71 = vmatprep.subr.mxu0 0.0
    %72 = vmatpush1.msra.mxu0 0.0
    %73 = vmatprep.subr.mxu0 0.0
    %74 = vmatpush1.msra.mxu0 0.0
    %75 = vmatprep.subr.mxu0 0.0
    %76 = vmatpush1.msra.mxu0 0.0
    %77 = vmatprep.subr.mxu0 0.0
    %78 = vmatpush1.msra.mxu0 0.0
    %79 = vmatprep.subr.mxu0 0.0
    %80 = vmatpush1.msra.mxu0 0.0
    %81 = vmatprep.subr.mxu0 0.0
    %82 = vmatpush1.msra.mxu0 0.0
    %83 = vmatprep.subr.mxu0 0.0
    %84 = vmatpush1.msra.mxu0 0.0
    %85 = vmatprep.subr.mxu0 0.0
    %86 = vmatpush1.msra.mxu0 0.0
    %87 = vmatprep.subr.mxu0 0.0
    %88 = vmatpush1.msra.mxu0 0.0
    %89 = vmatprep.subr.mxu0 0.0
    %90 = vmatpush1.msra.mxu0 0.0
    %91 = vmatprep.subr.mxu0 0.0
    %92 = vmatpush1.msra.mxu0 0.0
    %93 = vmatprep.subr.mxu0 0.0
    %94 = vmatpush1.msra.mxu0 0.0
    %95 = vmatprep.mubr.f32.mxu0 0.0
    %96 = vmatmul.mubr.f32.gmra.mrb[0].mxu0 %v29
    %v97 = vpop.f32.mrb[0].mxu0
    %v98 = vadd.f32 %v25, %v97
    %v99 = vpop.f32.mrb[0].mxu0
    %100 = vdwg.mxu0
    %v101 = vxor.u32 %v98, 2147483648
    %v102 = vmul.f32 %v101, 1.442695
    %v103 = vpow.pop %v102
    %v104 = vadd.f32 %v103, 1.0
    %v105 = vrcp.pop %v104
    %v106 = vmul.f32 1.0, %v105
    %vm107 = vcmask 48128
    %108 = vst.msk [vmem:[#allocation2] sm:$0xff] %vm107, %v106
    // Predicated region
    $region14: #{tpu_custom_call.1} parent=1 // pred_check
      _
    $region15: #{tpu_custom_call.1} parent=1 // pred_check_branch
      %110 = sbr.rel (0) target = $region17
    $region16: #{tpu_custom_call.1} parent=1 // pred_region
      %s112 = ssub.s32 128, 128
      %113 = vsyncadd [#allocation3], %s112
      %s115 = sshll.u32 [#allocation2], 4
      %s116 = int_to_ptr.vmem [resolvable:$true] %s115
      %118 = dma.vmem_to_hbm [thread:$0]  %s116, 128, %s3, [#allocation3]
    $region17: #{tpu_custom_call.1} parent=1 // pred_fallthru
      _
    // Predicated region
    $region18: #{tpu_custom_call.1} parent=1 // pred_check
      _
    $region19: #{tpu_custom_call.1} parent=1 // pred_check_branch
      %120 = sbr.rel (0) target = $region21
    $region20: #{tpu_custom_call.1} parent=1 // pred_region
      %121 = dma.done [#allocation3], 128
    $region21: #{tpu_custom_call.1} parent=1 // pred_fallthru
      _
    %122 = vsyncpa [#allocation3], 1

</llo_original>
